<compile_context>
chip_gen: v5e
topology: v5e:2x2
jax: 0.10.0
libtpu: 0.0.40
codegen_flags: <defaults>
</compile_context>

<pallas_src>
import functools
import math

import jax
import jax.numpy as jnp
from jax import lax
from jax.experimental import pallas as pl
from jax.experimental.pallas import tpu as pltpu


def _round_up(x, m):
    return ((x + m - 1) // m) * m


def _pad_to(a, shape):
    out = jnp.zeros(shape, a.dtype)
    return out.at[tuple(slice(0, s) for s in a.shape)].set(a)


# ---------------------------------------------------------------------------
# Fused GIN-stack kernel: one grid step per GIN layer. The adjacency and the
# activation slab live in VMEM scratch (loaded once); per-layer weights are
# streamed (double-buffered) by BlockSpec; eps comes from SMEM scalar prefetch.
# ---------------------------------------------------------------------------
def _gin_stack_kernel(eps_ref, a_hbm, x_hbm, w1_ref, w2_ref, vec_ref, o_ref,
                      act_ref, adj_ref, mask_ref, sem, *,
                      n_valid, bn_eps, matmul_dtype):
    l = pl.program_id(0)

    @pl.when(l == 0)
    def _init():
        # One-shot DMAs: adjacency -> single-buffered VMEM scratch, and the
        # input node features -> the resident activation-carrier scratch.
        cp_a = pltpu.make_async_copy(a_hbm, adj_ref, sem.at[0])
        cp_x = pltpu.make_async_copy(x_hbm, act_ref, sem.at[1])
        cp_a.start()
        cp_x.start()
        cp_a.wait()
        cp_x.wait()
        # Row-validity mask for the masked BatchNorm statistics (computed once).
        row_ids = lax.broadcasted_iota(jnp.int32, mask_ref.shape, 0)
        mask_ref[...] = (row_ids < n_valid).astype(jnp.float32)

    md = matmul_dtype
    x = act_ref[...]                                  # [N_pad, P] f32 activations
    mask = mask_ref[...]                              # [N_pad, 1]
    eps = eps_ref[l]                                  # SMEM scalar

    # Z = A @ X (MXU, optionally bf16) + (1 + eps) * X (exact, f32 on the VPU).
    z = jnp.dot(adj_ref[...], x.astype(md), preferred_element_type=jnp.float32)
    z = z + (1.0 + eps) * x

    # Inner-MLP layer 1: Linear (b1 omitted -- a per-channel constant cancels
    # under train-mode BatchNorm) -> BatchNorm1d (batch stats) -> ReLU.
    h = jnp.dot(z.astype(md), w1_ref[0], preferred_element_type=jnp.float32)
    inv_n = 1.0 / float(n_valid)
    hm = h * mask
    mean = jnp.sum(hm, axis=0, keepdims=True) * inv_n             # [1, P]
    ex2 = jnp.sum(hm * h, axis=0, keepdims=True) * inv_n          # [1, P]
    var = ex2 - mean * mean
    vec = vec_ref[0]                                              # [8, P]
    gamma, beta, b2 = vec[0:1, :], vec[1:2, :], vec[2:3, :]
    h = (h - mean) * lax.rsqrt(var + bn_eps) * gamma + beta
    h = jnp.maximum(h, 0.0)

    # Inner-MLP final fc (no activation).
    y = jnp.dot(h.astype(md), w2_ref[0], preferred_element_type=jnp.float32) + b2

    act_ref[...] = y                                  # carry to the next layer

    @pl.when(l == pl.num_programs(0) - 1)
    def _finalize():
        o_ref[...] = y


def gins_forward_pallas(x, edge_index, params, *, bn_eps=1e-5,
                        matmul_dtype=jnp.bfloat16, interpret=False):
    """Forward of the GIN stack. x: [N, D_in] node features, edge_index: [2, E]
    COO (row 0 = source j, row 1 = target i). Returns [N, out_dims]."""
    n, d_in = x.shape
    n_layers = len(params)
    hidden = params[0]["w1"].shape[0]
    out_dims = params[-1]["w2"].shape[0]
    p_feat = _round_up(max(d_in, hidden, out_dims), 128)   # lane-dense features
    # Lane-dense / MXU-pass-aligned node padding for small & medium graphs
    # (the dense adjacency only makes sense while N_pad^2 fits in VMEM anyway).
    n_pad = _round_up(max(n, 128), 128) if n <= 2048 else _round_up(n, 8)

    md = jnp.dtype(matmul_dtype)

    # Dense aggregation operator (built ONCE, shared by every layer):
    # A[i, j] = #edges j -> i  (aggr='add', flow='source_to_target').
    src = edge_index[0].astype(jnp.int32)
    dst = edge_index[1].astype(jnp.int32)
    adj = jnp.zeros((n_pad, n_pad), jnp.float32).at[dst, src].add(1.0)
    adj = adj.astype(md)                    # small integer counts: exact in bf16
    eps_all = jnp.stack([p["eps"].astype(jnp.float32).reshape(()) for p in params])

    # Per-layer MLP weights, zero-padded, pre-transposed to [in, out].
    w1_all = jnp.stack([_pad_to(p["w1"].T.astype(jnp.float32), (p_feat, p_feat))
                        for p in params]).astype(md)
    w2_all = jnp.stack([_pad_to(p["w2"].T.astype(jnp.float32), (p_feat, p_feat))
                        for p in params]).astype(md)

    # gamma / beta / b2 packed into one sublane-aligned [8, P] block per layer
    # (b1 intentionally dropped: it cancels under train-mode BatchNorm).
    def _vec_block(p):
        v = jnp.zeros((8, p_feat), jnp.float32)
        v = v.at[0, :p["gamma"].shape[0]].set(p["gamma"].astype(jnp.float32))
        v = v.at[1, :p["beta"].shape[0]].set(p["beta"].astype(jnp.float32))
        v = v.at[2, :p["b2"].shape[0]].set(p["b2"].astype(jnp.float32))
        return v
    vec_all = jnp.stack([_vec_block(p) for p in params])

    x_pad = _pad_to(x.astype(jnp.float32), (n_pad, p_feat))

    kernel = functools.partial(_gin_stack_kernel, n_valid=n,
                               bn_eps=float(bn_eps), matmul_dtype=matmul_dtype)

    # VMEM budget: resident scratches + streamed (double-buffered) weights +
    # compiler temporaries; clamp against this generation's physical VMEM.
    slab = n_pad * p_feat * 4
    needed = (n_pad * n_pad * md.itemsize                    # adjacency scratch
              + slab                                         # activation carrier
              + n_pad * 4                                    # row-validity mask
              + 2 * slab                                     # output block (2 bufs)
              + 2 * (2 * p_feat * p_feat * md.itemsize       # W1/W2, double-buffered
                     + 8 * p_feat * 4)                       # packed vectors
              + 6 * slab                                     # z/h/hm/y temporaries
              + (2 << 20))                                   # slack
    try:
        phys_vmem = int(getattr(pltpu.get_tpu_info(), "vmem_capacity_bytes",
                                64 * 1024 * 1024))
    except Exception:
        phys_vmem = 64 * 1024 * 1024
    vmem_limit = int(min(max(needed, 32 << 20), int(phys_vmem * 0.9)))

    layer_mat = pl.BlockSpec((1, p_feat, p_feat), lambda l, eps: (l, 0, 0))
    layer_vec = pl.BlockSpec((1, 8, p_feat), lambda l, eps: (l, 0, 0))

    out_pad = pl.pallas_call(
        kernel,
        out_shape=jax.ShapeDtypeStruct((n_pad, p_feat), jnp.float32),
        grid_spec=pltpu.PrefetchScalarGridSpec(
            num_scalar_prefetch=1,                       # eps_all -> SMEM
            grid=(n_layers,),
            in_specs=[
                pl.BlockSpec(memory_space=pl.ANY),       # adjacency (DMA'd once)
                pl.BlockSpec(memory_space=pl.ANY),       # X (DMA'd once)
                layer_mat,                               # W1_l  [P, P]
                layer_mat,                               # W2_l  [P, P]
                layer_vec,                               # gamma/beta/b2 packed
            ],
            out_specs=pl.BlockSpec((n_pad, p_feat), lambda l, eps: (0, 0)),
            scratch_shapes=[
                pltpu.VMEM((n_pad, p_feat), jnp.float32),   # activation carrier
                pltpu.VMEM((n_pad, n_pad), matmul_dtype),   # resident adjacency
                pltpu.VMEM((n_pad, 1), jnp.float32),        # row-validity mask
                pltpu.SemaphoreType.DMA((2,)),
            ],
        ),
        compiler_params=pltpu.CompilerParams(
            dimension_semantics=("arbitrary",),          # layers are sequential
            vmem_limit_bytes=vmem_limit,
        ),
        interpret=interpret,
    )(eps_all, adj, x_pad, w1_all, w2_all, vec_all)

    return out_pad[:n, :out_dims]


def init_gins_params(key, n_layers, in_dims, hidden_dims, out_dims):
    """Params mirroring the PyTorch GINs construction: Linear default init
    U(-1/sqrt(fan_in), +), BatchNorm gamma=1 / beta=0, GIN eps ~ N(0,1)."""
    mlp_dims = []
    d_in = in_dims
    for _ in range(n_layers - 1):
        mlp_dims.append((d_in, hidden_dims, hidden_dims))
        d_in = hidden_dims
    mlp_dims.append((hidden_dims, hidden_dims, out_dims))

    params = []
    for (di, dh, do) in mlp_dims:
        key, k_eps, k_w1, k_b1, k_w2, k_b2 = jax.random.split(key, 6)
        bnd1 = 1.0 / math.sqrt(di)
        bnd2 = 1.0 / math.sqrt(dh)
        params.append({
            "eps": jax.random.normal(k_eps, (), jnp.float32),
            "w1": jax.random.uniform(k_w1, (dh, di), jnp.float32, -bnd1, bnd1),
            "b1": jax.random.uniform(k_b1, (dh,), jnp.float32, -bnd1, bnd1),
            "gamma": jnp.ones((dh,), jnp.float32),
            "beta": jnp.zeros((dh,), jnp.float32),
            "w2": jax.random.uniform(k_w2, (do, dh), jnp.float32, -bnd2, bnd2),
            "b2": jax.random.uniform(k_b2, (do,), jnp.float32, -bnd2, bnd2),
        })
    return params


def gins_forward_ref(x, edge_index, params, bn_eps=1e-5):
    """Plain-JAX reference mirroring the PyTorch forward (train-mode BatchNorm,
    b1 included -- it cancels, which validates the kernel's b1 elision)."""
    src = edge_index[0]
    dst = edge_index[1]
    n = x.shape[0]
    for p in params:
        s = jnp.zeros((n, x.shape[1]), x.dtype).at[dst].add(x[src])
        z = (1.0 + p["eps"]) * x + s
        h = z @ p["w1"].T + p["b1"]
        mean = jnp.mean(h, axis=0)
        var = jnp.var(h, axis=0)                       # biased, as in BN
        h = (h - mean) * lax.rsqrt(var + bn_eps) * p["gamma"] + p["beta"]
        h = jnp.maximum(h, 0.0)
        x = h @ p["w2"].T + p["b2"]
    return x


if __name__ == "__main__":
    key = jax.random.PRNGKey(0)
    k_x, k_e, k_p = jax.random.split(key, 3)

    # Small graph consistent with GINs.forward: X [N, D_in], edge_index [2, E].
    N, E = 48, 192
    n_layers, in_dims, hidden_dims, out_dims = 3, 8, 32, 16

    x = jax.random.normal(k_x, (N, in_dims), dtype=jnp.float32)
    edge_index = jax.random.randint(k_e, (2, E), 0, N, dtype=jnp.int32)
    params = init_gins_params(k_p, n_layers, in_dims, hidden_dims, out_dims)

    ref = gins_forward_ref(x, edge_index, params)

    # f32 MXU path: tight numerics check against the plain-JAX reference.
    out_f32 = jax.block_until_ready(
        gins_forward_pallas(x, edge_index, params, matmul_dtype=jnp.float32))
    assert out_f32.shape == (N, out_dims)
    assert jnp.allclose(out_f32, ref, atol=3e-4, rtol=3e-4), (
        f"f32 max abs err = {jnp.max(jnp.abs(out_f32 - ref))}")

    # Default bf16 MXU path (f32 accumulation; self/eps term stays f32).
    out_bf16 = jax.block_until_ready(gins_forward_pallas(x, edge_index, params))
    assert out_bf16.shape == (N, out_dims)
    assert jnp.allclose(out_bf16, ref, atol=1.5e-1, rtol=1.5e-1), (
        f"bf16 max abs err = {jnp.max(jnp.abs(out_bf16 - ref))}")

    print("KERNEL_OK")
</pallas_src>

<mosaic_0001>
module attributes {stable_mosaic.version = 11 : i64} {
  func.func @_gin_stack_kernel(%arg0: i32, %arg1: memref<3xf32, #tpu.memory_space<smem>>, %arg2: memref<128x128xf32, #tpu.memory_space<any>>, %arg3: memref<128x128xf32, #tpu.memory_space<any>>, %arg4: memref<1x128x128xf32, #tpu.memory_space<vmem>>, %arg5: memref<1x128x128xf32, #tpu.memory_space<vmem>>, %arg6: memref<1x8x128xf32, #tpu.memory_space<vmem>>, %arg7: memref<128x128xf32, #tpu.memory_space<vmem>>, %arg8: memref<128x128xf32, #tpu.memory_space<vmem>>, %arg9: memref<128x128xf32, #tpu.memory_space<vmem>>, %arg10: memref<128x1xf32, #tpu.memory_space<vmem>>, %arg11: memref<2x!tpu.dma_semaphore, #tpu.memory_space<semaphore_mem>>) attributes {dimension_semantics = [#tpu.dimension_semantics<arbitrary>], iteration_bounds = array<i64: 3>, scalar_prefetch = 1 : i64, scratch_operands = 4 : i64, tpu.core_type = #tpu.core_type<tc>, window_params = [{}, {}, {transform_indices = @transform_2, window_bounds = array<i64: 1, 128, 128>}, {transform_indices = @transform_3, window_bounds = array<i64: 1, 128, 128>}, {transform_indices = @transform_4, window_bounds = array<i64: 1, 8, 128>}, {pipeline_mode = #tpu.pipeline_mode<synchronous>, transform_indices = @transform_5, window_bounds = array<i64: 128, 128>}]} {
    %c0_i32 = arith.constant 0 : i32
    %0 = arith.cmpi eq, %arg0, %c0_i32 : i32
    %1 = arith.extui %0 : i1 to i32
    %c0_i32_0 = arith.constant 0 : i32
    %2 = arith.cmpi ne, %1, %c0_i32_0 : i32
    scf.if %2 {
      %c0_i32_27 = arith.constant 0 : i32
      %56 = tpu.memref_slice %arg11[%c0_i32_27] : memref<2x!tpu.dma_semaphore, #tpu.memory_space<semaphore_mem>> -> memref<1x!tpu.dma_semaphore, #tpu.memory_space<semaphore_mem>>
      %57 = tpu.memref_squeeze %56 : memref<1x!tpu.dma_semaphore, #tpu.memory_space<semaphore_mem>> -> memref<!tpu.dma_semaphore, #tpu.memory_space<semaphore_mem>>
      tpu.enqueue_dma source(%arg2 : memref<128x128xf32, #tpu.memory_space<any>>) target(%arg9 : memref<128x128xf32, #tpu.memory_space<vmem>>) target_semaphore(%57 : memref<!tpu.dma_semaphore, #tpu.memory_space<semaphore_mem>>)
      %c1_i32 = arith.constant 1 : i32
      %58 = tpu.memref_slice %arg11[%c1_i32] : memref<2x!tpu.dma_semaphore, #tpu.memory_space<semaphore_mem>> -> memref<1x!tpu.dma_semaphore, #tpu.memory_space<semaphore_mem>>
      %59 = tpu.memref_squeeze %58 : memref<1x!tpu.dma_semaphore, #tpu.memory_space<semaphore_mem>> -> memref<!tpu.dma_semaphore, #tpu.memory_space<semaphore_mem>>
      tpu.enqueue_dma source(%arg3 : memref<128x128xf32, #tpu.memory_space<any>>) target(%arg8 : memref<128x128xf32, #tpu.memory_space<vmem>>) target_semaphore(%59 : memref<!tpu.dma_semaphore, #tpu.memory_space<semaphore_mem>>)
      %c0_i32_28 = arith.constant 0 : i32
      %60 = tpu.memref_slice %arg11[%c0_i32_28] : memref<2x!tpu.dma_semaphore, #tpu.memory_space<semaphore_mem>> -> memref<1x!tpu.dma_semaphore, #tpu.memory_space<semaphore_mem>>
      %61 = tpu.memref_squeeze %60 : memref<1x!tpu.dma_semaphore, #tpu.memory_space<semaphore_mem>> -> memref<!tpu.dma_semaphore, #tpu.memory_space<semaphore_mem>>
      tpu.wait_dma2 semaphore(%61 : memref<!tpu.dma_semaphore, #tpu.memory_space<semaphore_mem>>) src(%arg2 : memref<128x128xf32, #tpu.memory_space<any>>) dst(%arg9 : memref<128x128xf32, #tpu.memory_space<vmem>>)
      %c1_i32_29 = arith.constant 1 : i32
      %62 = tpu.memref_slice %arg11[%c1_i32_29] : memref<2x!tpu.dma_semaphore, #tpu.memory_space<semaphore_mem>> -> memref<1x!tpu.dma_semaphore, #tpu.memory_space<semaphore_mem>>
      %63 = tpu.memref_squeeze %62 : memref<1x!tpu.dma_semaphore, #tpu.memory_space<semaphore_mem>> -> memref<!tpu.dma_semaphore, #tpu.memory_space<semaphore_mem>>
      tpu.wait_dma2 semaphore(%63 : memref<!tpu.dma_semaphore, #tpu.memory_space<semaphore_mem>>) src(%arg3 : memref<128x128xf32, #tpu.memory_space<any>>) dst(%arg8 : memref<128x128xf32, #tpu.memory_space<vmem>>)
      %64 = tpu.iota {dimensions = array<i32: 0>} : vector<128x1xi32>
      %c48_i32 = arith.constant 48 : i32
      %65 = vector.broadcast %c48_i32 : i32 to vector<128x1xi32>
      %66 = arith.cmpi slt, %64, %65 : vector<128x1xi32>
      %67 = arith.extui %66 : vector<128x1xi1> to vector<128x1xi32>
      %68 = arith.sitofp %67 : vector<128x1xi32> to vector<128x1xf32>
      %c0_30 = arith.constant 0 : index
      %c0_31 = arith.constant 0 : index
      %69 = vector.load %arg10[%c0_30, %c0_31] : memref<128x1xf32, #tpu.memory_space<vmem>>, vector<128x1xf32>
      tpu.vector_store %arg10[%c0_30, %c0_31], %68 {strides = array<i32>} : memref<128x1xf32, #tpu.memory_space<vmem>>, vector<128x1xf32>,
    } else {
    }
    %c0 = arith.constant 0 : index
    %c0_1 = arith.constant 0 : index
    %3 = vector.load %arg8[%c0, %c0_1] : memref<128x128xf32, #tpu.memory_space<vmem>>, vector<128x128xf32>
    %c0_2 = arith.constant 0 : index
    %c0_3 = arith.constant 0 : index
    %4 = vector.load %arg10[%c0_2, %c0_3] : memref<128x1xf32, #tpu.memory_space<vmem>>, vector<128x1xf32>
    %5 = arith.index_cast %arg0 : i32 to index
    %6 = memref.load %arg1[%5] : memref<3xf32, #tpu.memory_space<smem>>
    %c0_4 = arith.constant 0 : index
    %c0_5 = arith.constant 0 : index
    %7 = vector.load %arg9[%c0_4, %c0_5] : memref<128x128xf32, #tpu.memory_space<vmem>>, vector<128x128xf32>
    %cst = arith.constant dense<0.000000e+00> : vector<128x128xf32>
    %8 = tpu.matmul %7, %3, %cst {dimension_numbers = #tpu.dot_dimension_numbers<[1], [0], [0], [1], [0, 0, 1, 1], [], []>} : vector<128x128xf32>, vector<128x128xf32>, vector<128x128xf32> -> vector<128x128xf32>
    %cst_6 = arith.constant 1.000000e+00 : f32
    %9 = arith.addf %cst_6, %6 : f32
    %10 = vector.broadcast %9 : f32 to vector<128x128xf32>
    %11 = arith.mulf %10, %3 : vector<128x128xf32>
    %12 = arith.addf %8, %11 : vector<128x128xf32>
    %c0_7 = arith.constant 0 : index
    %c0_8 = arith.constant 0 : index
    %c0_9 = arith.constant 0 : index
    %13 = vector.load %arg4[%c0_7, %c0_8, %c0_9] : memref<1x128x128xf32, #tpu.memory_space<vmem>>, vector<1x128x128xf32>
    %14 = vector.shape_cast %13 : vector<1x128x128xf32> to vector<128x128xf32>
    %cst_10 = arith.constant dense<0.000000e+00> : vector<128x128xf32>
    %15 = tpu.matmul %12, %14, %cst_10 {dimension_numbers = #tpu.dot_dimension_numbers<[1], [0], [0], [1], [0, 0, 1, 1], [], []>} : vector<128x128xf32>, vector<128x128xf32>, vector<128x128xf32> -> vector<128x128xf32>
    %16 = vector.broadcast %4 : vector<128x1xf32> to vector<128x128xf32>
    %17 = arith.mulf %15, %16 : vector<128x128xf32>
    %cst_11 = arith.constant dense<0.000000e+00> : vector<128xf32>
    %18 = vector.multi_reduction <add>, %17, %cst_11 [0] : vector<128x128xf32> to vector<128xf32>
    %19 = vector.shape_cast %18 : vector<128xf32> to vector<1x128xf32>
    %cst_12 = arith.constant 0.020833334 : f32
    %20 = vector.broadcast %cst_12 : f32 to vector<1x128xf32>
    %21 = arith.mulf %19, %20 : vector<1x128xf32>
    %22 = arith.mulf %17, %15 : vector<128x128xf32>
    %cst_13 = arith.constant dense<0.000000e+00> : vector<128xf32>
    %23 = vector.multi_reduction <add>, %22, %cst_13 [0] : vector<128x128xf32> to vector<128xf32>
    %24 = vector.shape_cast %23 : vector<128xf32> to vector<1x128xf32>
    %cst_14 = arith.constant 0.020833334 : f32
    %25 = vector.broadcast %cst_14 : f32 to vector<1x128xf32>
    %26 = arith.mulf %24, %25 : vector<1x128xf32>
    %27 = arith.mulf %21, %21 : vector<1x128xf32>
    %28 = arith.subf %26, %27 : vector<1x128xf32>
    %c0_15 = arith.constant 0 : index
    %c0_16 = arith.constant 0 : index
    %c0_17 = arith.constant 0 : index
    %29 = vector.load %arg6[%c0_15, %c0_16, %c0_17] : memref<1x8x128xf32, #tpu.memory_space<vmem>>, vector<1x8x128xf32>
    %30 = vector.shape_cast %29 : vector<1x8x128xf32> to vector<8x128xf32>
    %31 = vector.extract_strided_slice %30 {offsets = [0, 0], sizes = [1, 128], strides = [1, 1]} : vector<8x128xf32> to vector<1x128xf32>
    %32 = vector.extract_strided_slice %30 {offsets = [1, 0], sizes = [1, 128], strides = [1, 1]} : vector<8x128xf32> to vector<1x128xf32>
    %33 = vector.extract_strided_slice %30 {offsets = [2, 0], sizes = [1, 128], strides = [1, 1]} : vector<8x128xf32> to vector<1x128xf32>
    %34 = vector.broadcast %21 : vector<1x128xf32> to vector<128x128xf32>
    %35 = arith.subf %15, %34 : vector<128x128xf32>
    %cst_18 = arith.constant 9.99999974E-6 : f32
    %36 = vector.broadcast %cst_18 : f32 to vector<1x128xf32>
    %37 = arith.addf %28, %36 : vector<1x128xf32>
    %38 = math.rsqrt %37 : vector<1x128xf32>
    %39 = vector.broadcast %38 : vector<1x128xf32> to vector<128x128xf32>
    %40 = arith.mulf %35, %39 : vector<128x128xf32>
    %41 = vector.broadcast %31 : vector<1x128xf32> to vector<128x128xf32>
    %42 = arith.mulf %40, %41 : vector<128x128xf32>
    %43 = vector.broadcast %32 : vector<1x128xf32> to vector<128x128xf32>
    %44 = arith.addf %42, %43 : vector<128x128xf32>
    %cst_19 = arith.constant 0.000000e+00 : f32
    %45 = vector.broadcast %cst_19 : f32 to vector<128x128xf32>
    %46 = arith.maximumf %44, %45 : vector<128x128xf32>
    %c0_20 = arith.constant 0 : index
    %c0_21 = arith.constant 0 : index
    %c0_22 = arith.constant 0 : index
    %47 = vector.load %arg5[%c0_20, %c0_21, %c0_22] : memref<1x128x128xf32, #tpu.memory_space<vmem>>, vector<1x128x128xf32>
    %48 = vector.shape_cast %47 : vector<1x128x128xf32> to vector<128x128xf32>
    %cst_23 = arith.constant dense<0.000000e+00> : vector<128x128xf32>
    %49 = tpu.matmul %46, %48, %cst_23 {dimension_numbers = #tpu.dot_dimension_numbers<[1], [0], [0], [1], [0, 0, 1, 1], [], []>} : vector<128x128xf32>, vector<128x128xf32>, vector<128x128xf32> -> vector<128x128xf32>
    %50 = vector.broadcast %33 : vector<1x128xf32> to vector<128x128xf32>
    %51 = arith.addf %49, %50 : vector<128x128xf32>
    %c0_24 = arith.constant 0 : index
    %c0_25 = arith.constant 0 : index
    %52 = vector.load %arg8[%c0_24, %c0_25] : memref<128x128xf32, #tpu.memory_space<vmem>>, vector<128x128xf32>
    tpu.vector_store %arg8[%c0_24, %c0_25], %51 {strides = array<i32>} : memref<128x128xf32, #tpu.memory_space<vmem>>, vector<128x128xf32>,
    %c2_i32 = arith.constant 2 : i32
    %53 = arith.cmpi eq, %arg0, %c2_i32 : i32
    %54 = arith.extui %53 : i1 to i32
    %c0_i32_26 = arith.constant 0 : i32
    %55 = arith.cmpi ne, %54, %c0_i32_26 : i32
    scf.if %55 {
      %c0_27 = arith.constant 0 : index
      %c0_28 = arith.constant 0 : index
      %56 = vector.load %arg7[%c0_27, %c0_28] : memref<128x128xf32, #tpu.memory_space<vmem>>, vector<128x128xf32>
      tpu.vector_store %arg7[%c0_27, %c0_28], %51 {strides = array<i32>} : memref<128x128xf32, #tpu.memory_space<vmem>>, vector<128x128xf32>,
    } else {
    }
    return
  }
  func.func @transform_2(%arg0: i32, %arg1: memref<3xf32, #tpu.memory_space<smem>>) -> (i32, i32, i32) {
    %c0_i32 = arith.constant 0 : i32
    %c0_i32_0 = arith.constant 0 : i32
    %c0_i32_1 = arith.constant 0 : i32
    return %arg0, %c0_i32, %c0_i32_0 : i32, i32, i32
  }
  func.func @transform_3(%arg0: i32, %arg1: memref<3xf32, #tpu.memory_space<smem>>) -> (i32, i32, i32) {
    %c0_i32 = arith.constant 0 : i32
    %c0_i32_0 = arith.constant 0 : i32
    %c0_i32_1 = arith.constant 0 : i32
    return %arg0, %c0_i32, %c0_i32_0 : i32, i32, i32
  }
  func.func @transform_4(%arg0: i32, %arg1: memref<3xf32, #tpu.memory_space<smem>>) -> (i32, i32, i32) {
    %c0_i32 = arith.constant 0 : i32
    %c0_i32_0 = arith.constant 0 : i32
    %c0_i32_1 = arith.constant 0 : i32
    return %arg0, %c0_i32, %c0_i32_0 : i32, i32, i32
  }
  func.func @transform_5(%arg0: i32, %arg1: memref<3xf32, #tpu.memory_space<smem>>) -> (i32, i32) {
    %c0_i32 = arith.constant 0 : i32
    %c0_i32_0 = arith.constant 0 : i32
    %c0_i32_1 = arith.constant 0 : i32
    return %c0_i32, %c0_i32_0 : i32, i32
  }
}

</mosaic_0001>

<llo_original>
// kernel: tpu_custom_call.1
$region0: #{tpu_custom_call.1}
  #allocation0 [shape = 'u32[]', space=smem, size = 0x4, offset = 0x4, fixed_abs, tag = 'smem constant byte address 0x4 - core index']
  #allocation1 [shape = 'u32[72,128]{1,0:T(1,128)}', space=vmem, size = 0x9000, scoped, tag = 'internal scratch']
  #allocation2 [shape = 'f32[128,128]{1,0:T(8,128)}', space=vmem, size = 0x10000, scoped, tag = 'scratch operand']
  #allocation3 [shape = 'f32[128,128]{1,0:T(8,128)}', space=vmem, size = 0x10000, scoped, tag = 'scratch operand']
  #allocation4 [shape = 'f32[128,1]{1,0:T(8,128)}', space=vmem, size = 0x10000, scoped, tag = 'scratch operand']
  #allocation5 [shape = 's32[2]{0}', space=sflag, size = 0x8, scoped, tag = 'scratch operand']
  #allocation6 [shape = 's32[1]{0}', space=sflag, size = 0x4, scoped, tag = 'scoped memory for tpu_custom_call.1']
  #allocation7 [shape = 'u8[512]{0}', space=smem, size = 0x200, scoped, tag = 'prefetched SMEM operand 0']
  #allocation15 [shape = 's32[]', space=sflag, size = 0x4, offset = 0, fixed_abs, tag = 'sflag constant byte address 0x0 - dummy sync flag']
  #allocation16 [shape = 's32[]', space=sflag, size = 0x4, offset = 0, fixed_abs, tag = 'sflag constant byte address 0x0 - dummy sync flag']
  #allocation17 [shape = 'u32[]', space=smem, size = 0x4, offset = 0x44, fixed_abs, tag = 'smem constant byte address 0x44 - assertion arg 0']
  #allocation18 [shape = 'u32[]', space=smem, size = 0x4, offset = 0x48, fixed_abs, tag = 'smem constant byte address 0x48 - assertion arg 1']
  #allocation19 [shape = 's32[]', space=sflag, size = 0x4, offset = 0, fixed_abs, tag = 'sflag constant byte address 0x0 - dummy sync flag']
  #allocation20 [shape = 's32[]', space=sflag, size = 0x4, offset = 0, fixed_abs, tag = 'sflag constant byte address 0x0 - dummy sync flag']
  %s0 = inlined_call_operand.hbm [shape: f32[3], index: 0, kind: input, shape index: {}]
  %s1 = inlined_call_operand.hbm [shape: f32[128,128], index: 1, kind: input, shape index: {}]
  %s2 = inlined_call_operand.hbm [shape: f32[128,128], index: 2, kind: input, shape index: {}]
  %s3 = inlined_call_operand.hbm [shape: f32[3,128,128], index: 3, kind: input, shape index: {}]
  %s4 = inlined_call_operand.hbm [shape: f32[3,128,128], index: 4, kind: input, shape index: {}]
  %s5 = inlined_call_operand.hbm [shape: f32[3,8,128], index: 5, kind: input, shape index: {}]
  %s6 = inlined_call_operand.hbm [shape: f32[128,128], index: 6, kind: output, shape index: {}]
  %s7 = sld [smem:[#allocation0]]
  $region73: #{tpu_custom_call.1} parent=0
    _
  %s9 = ssub.s32 1, %s7
  %s10 = scalar_select 0, %s9, %s7
  %s12 = sshll.u32 %s0, 4
  %s13 = int_to_ptr.hbm [resolvable:$true] %s12
  %15 = dma.hbm_to_smem %s13, 16, [#allocation7], [#allocation6]
  %17 = dma.done [#allocation6], 16
  %18 = sfence
  $region1: #{tpu_custom_call.1} parent=0
    #allocation8 [shape = 'u8[131072]{0}', space=vmem, size = 0x20000, scoped, tag = 'input window, operand 3']
    #allocation9 [shape = 's32[2]{0}', space=sflag, size = 0x8, scoped, tag = 'scoped memory for tpu_custom_call.1']
    #allocation10 [shape = 's32[2]{0}', space=sflag, size = 0x8, scoped, tag = 'scoped memory for tpu_custom_call.1']
    #allocation11 [shape = 'u8[131072]{0}', space=vmem, size = 0x20000, scoped, tag = 'input window, operand 4']
    #allocation12 [shape = 's32[2]{0}', space=sflag, size = 0x8, scoped, tag = 'scoped memory for tpu_custom_call.1']
    #allocation13 [shape = 'u8[8192]{0}', space=vmem, size = 0x2000, scoped, tag = 'input window, operand 5']
    #allocation14 [shape = 'u8[65536]{0}', space=vmem, size = 0x10000, scoped, tag = 'output window, operand 0, single buffered']
    %19 = vsyncpa [#allocation9], 0
    %s20 = scalar_lea.sflag [#allocation9], 1
    %21 = vsyncpa %s20, 0
    %22 = vsyncpa [#allocation12], 0
    %s23 = scalar_lea.sflag [#allocation12], 1
    %24 = vsyncpa %s23, 0
    %25 = vsyncpa [#allocation10], 0
    loop: start=0, step=1, limit=5
    $region2: #{tpu_custom_call.1} parent=1 // loop_pre_header
      _
    $region3: #{tpu_custom_call.1} parent=1 // loop_header
      %s27 = sphi 0, %s31
      %p28 = scmp.ge.s32.totalorder %s27, 5
      %s37 = sphi 0, %s39
      %s40 = sphi 0, %s37
      %s41 = sphi 0, %s40
      %s57 = sphi 0, %s41
      %s63 = sphi 0, %s65
      %s66 = sphi 0, %s63
      %s67 = sphi 0, %s66
      %s83 = sphi 0, %s67
      %s89 = sphi 0, %s91
      %s92 = sphi 0, %s89
      %s93 = sphi 0, %s92
      %s109 = sphi 0, %s93
      %s113 = sphi 0, %s113
      %s115 = sphi 0, %s113
      %s116 = sphi 0, %s115
      %s130 = sphi 0, %s116
    $region4: #{tpu_custom_call.1} parent=1 // loop_header_branch
      %30 = sbr.rel (%p28) target = $region8
    $region5: #{tpu_custom_call.1} parent=1 // loop_body
      %s32 = ssub.s32 %s27, 1
      %s33 = ssub.s32 %s27, 2
      %s34 = sadd.s32 %s27, 1
      %s35 = ssub.s32 %s27, %s34
      %p36 = scmp.eq.s32.totalorder %s35, 0
      %s38 = sadd.s32 %s37, 1
      %s39 = scalar_select %p36, %s37, %s38
      %p42 = pneg %p36
      %p43 = scmp.eq.s32.totalorder %s27, 2
      %p44 = por %p42, %p43
      %p45 = scmp.ne.s32.totalorder %s37, %s40
      %p46 = scmp.eq.s32.totalorder %s27, 0
      %p47 = por %p45, %p46
      %p48 = scmp.ne.s32.totalorder %s37, %s40
      %p49 = scmp.eq.s32.totalorder %s32, 2
      %p50 = por %p48, %p49
      %p51 = scmp.ne.s32.totalorder %s40, %s41
      %p52 = scmp.eq.s32.totalorder %s32, 0
      %p53 = por %p51, %p52
      %p54 = scmp.ne.s32.totalorder %s40, %s41
      %p55 = scmp.eq.s32.totalorder %s33, 2
      %p56 = por %p54, %p55
      %p58 = scmp.ne.s32.totalorder %s41, %s57
      %p59 = scmp.eq.s32.totalorder %s33, 0
      %p60 = por %p58, %p59
      %s61 = ssub.s32 %s27, %s34
      %p62 = scmp.eq.s32.totalorder %s61, 0
      %s64 = sadd.s32 %s63, 1
      %s65 = scalar_select %p62, %s63, %s64
      %p68 = pneg %p62
      %p69 = scmp.eq.s32.totalorder %s27, 2
      %p70 = por %p68, %p69
      %p71 = scmp.ne.s32.totalorder %s63, %s66
      %p72 = scmp.eq.s32.totalorder %s27, 0
      %p73 = por %p71, %p72
      %p74 = scmp.ne.s32.totalorder %s63, %s66
      %p75 = scmp.eq.s32.totalorder %s32, 2
      %p76 = por %p74, %p75
      %p77 = scmp.ne.s32.totalorder %s66, %s67
      %p78 = scmp.eq.s32.totalorder %s32, 0
      %p79 = por %p77, %p78
      %p80 = scmp.ne.s32.totalorder %s66, %s67
      %p81 = scmp.eq.s32.totalorder %s33, 2
      %p82 = por %p80, %p81
      %p84 = scmp.ne.s32.totalorder %s67, %s83
      %p85 = scmp.eq.s32.totalorder %s33, 0
      %p86 = por %p84, %p85
      %s87 = ssub.s32 %s27, %s34
      %p88 = scmp.eq.s32.totalorder %s87, 0
      %s90 = sadd.s32 %s89, 1
      %s91 = scalar_select %p88, %s89, %s90
      %p94 = pneg %p88
      %p95 = scmp.eq.s32.totalorder %s27, 2
      %p96 = por %p94, %p95
      %p97 = scmp.ne.s32.totalorder %s89, %s92
      %p98 = scmp.eq.s32.totalorder %s27, 0
      %p99 = por %p97, %p98
      %p100 = scmp.ne.s32.totalorder %s89, %s92
      %p101 = scmp.eq.s32.totalorder %s32, 2
      %p102 = por %p100, %p101
      %p103 = scmp.ne.s32.totalorder %s92, %s93
      %p104 = scmp.eq.s32.totalorder %s32, 0
      %p105 = por %p103, %p104
      %p106 = scmp.ne.s32.totalorder %s92, %s93
      %p107 = scmp.eq.s32.totalorder %s33, 2
      %p108 = por %p106, %p107
      %p110 = scmp.ne.s32.totalorder %s93, %s109
      %p111 = scmp.eq.s32.totalorder %s33, 0
      %p112 = por %p110, %p111
      %s114 = sadd.s32 %s113, 1
      %p117 = scmp.eq.s32.totalorder %s27, 2
      %p118 = scmp.ne.s32.totalorder %s113, %s115
      %p119 = scmp.eq.s32.totalorder %s27, 0
      %p120 = por %p118, %p119
      %p121 = scmp.ne.s32.totalorder %s113, %s115
      %p122 = scmp.eq.s32.totalorder %s32, 2
      %p123 = por %p121, %p122
      %p124 = scmp.ne.s32.totalorder %s115, %s116
      %p125 = scmp.eq.s32.totalorder %s32, 0
      %p126 = por %p124, %p125
      %p127 = scmp.ne.s32.totalorder %s115, %s116
      %p128 = scmp.eq.s32.totalorder %s33, 2
      %p129 = por %p127, %p128
      %p131 = scmp.ne.s32.totalorder %s116, %s130
      %p132 = scmp.eq.s32.totalorder %s33, 0
      %p133 = por %p131, %p132
      %p134 = scmp.le.s32.totalorder 1, %s27
      %p135 = scmp.lt.s32.totalorder %s27, 4
      %p136 = pnand %p134, %p135
      %p137 = pneg %p136
      // Predicated region
      $region9: #{tpu_custom_call.1} parent=5 // pred_check
        _
      $region10: #{tpu_custom_call.1} parent=5 // pred_check_branch
        %139 = sbr.rel (%p136) target = $region12
      $region11: #{tpu_custom_call.1} parent=5 // pred_region
        %s140 = ssub.s32 %s27, 1
      $region12: #{tpu_custom_call.1} parent=5 // pred_fallthru
        _
      %p141 = scmp.lt.s32.totalorder %s27, 3
      // Predicated region
      $region13: #{tpu_custom_call.1} parent=5 // pred_check
        %p142 = pneg %p141
      $region14: #{tpu_custom_call.1} parent=5 // pred_check_branch
        %144 = sbr.rel (%p142) target = $region16
      $region15: #{tpu_custom_call.1} parent=5 // pred_region
        // Predicated region
        $region17: #{tpu_custom_call.1} parent=15 // pred_check
          %p145 = pneg %p47
        $region18: #{tpu_custom_call.1} parent=15 // pred_check_branch
          %147 = sbr.rel (%p145) target = $region20
        $region19: #{tpu_custom_call.1} parent=15 // pred_region
          %s148 = sand.u32 %s37, 1
          %s149 = scalar_lea.sflag [#allocation9], %s148
          %s150 = sand.u32 %s37, 1
          %s151 = smul.addr %s150, 128
          %s152 = scalar_lea.vmem [#allocation8], %s151
          %154 = vsyncadd %s149, 0
          %s155 = smul.addr %s27, 16
          %s156 = smul.addr %s155, 8
          %s157 = scalar_lea.hbm %s3, %s156
          %s158 = sshll.u32 %s157, 4
          %s159 = int_to_ptr.hbm [resolvable:$true] %s158
          %s160 = sshll.u32 %s152, 4
          %s161 = int_to_ptr.vmem [resolvable:$true] %s160
          %166 = dma.hbm_to_vmem [thread:$0]  %s159, 2048, %s161, %s149, 128, 128, 8
        $region20: #{tpu_custom_call.1} parent=15 // pred_fallthru
          _
        // Predicated region
        $region21: #{tpu_custom_call.1} parent=15 // pred_check
          %p167 = pneg %p73
        $region22: #{tpu_custom_call.1} parent=15 // pred_check_branch
          %169 = sbr.rel (%p167) target = $region24
        $region23: #{tpu_custom_call.1} parent=15 // pred_region
          %s170 = sand.u32 %s27, 1
          %s171 = scalar_lea.sflag [#allocation12], %s170
          %s172 = sand.u32 %s63, 1
          %s173 = smul.addr %s172, 128
          %s174 = scalar_lea.vmem [#allocation11], %s173
          %176 = vsyncadd %s171, 0
          %s177 = smul.addr %s27, 16
          %s178 = smul.addr %s177, 8
          %s179 = scalar_lea.hbm %s4, %s178
          %s180 = sshll.u32 %s179, 4
          %s181 = int_to_ptr.hbm [resolvable:$true] %s180
          %s182 = sshll.u32 %s174, 4
          %s183 = int_to_ptr.vmem [resolvable:$true] %s182
          %188 = dma.hbm_to_vmem [thread:$0]  %s181, 2048, %s183, %s171, 128, 128, 8
        $region24: #{tpu_custom_call.1} parent=15 // pred_fallthru
          _
        // Predicated region
        $region25: #{tpu_custom_call.1} parent=15 // pred_check
          %p189 = pneg %p99
        $region26: #{tpu_custom_call.1} parent=15 // pred_check_branch
          %191 = sbr.rel (%p189) target = $region28
        $region27: #{tpu_custom_call.1} parent=15 // pred_region
          %s192 = sand.u32 %s27, 1
          %s193 = scalar_lea.sflag [#allocation12], %s192
          %s194 = sand.u32 %s89, 1
          %s195 = smul.addr %s194, 8
          %s196 = scalar_lea.vmem [#allocation13], %s195
          %198 = vsyncadd %s193, 0
          %s199 = smul.addr %s27, 8
          %s200 = scalar_lea.hbm %s5, %s199
          %s202 = sshll.u32 %s200, 4
          %s203 = int_to_ptr.hbm [resolvable:$true] %s202
          %s204 = sshll.u32 %s196, 4
          %s205 = int_to_ptr.vmem [resolvable:$true] %s204
          %207 = dma.hbm_to_vmem [thread:$0]  %s203, 128, %s205, %s193
        $region28: #{tpu_custom_call.1} parent=15 // pred_fallthru
          _
      $region16: #{tpu_custom_call.1} parent=5 // pred_fallthru
        _
      %p208 = scmp.le.s32.totalorder 1, %s27
      %p209 = scmp.lt.s32.totalorder %s27, 4
      %p210 = pnand %p208, %p209
      %p211 = pneg %p210
      // Predicated region
      $region29: #{tpu_custom_call.1} parent=5 // pred_check
        _
      $region30: #{tpu_custom_call.1} parent=5 // pred_check_branch
        %213 = sbr.rel (%p210) target = $region32
      $region31: #{tpu_custom_call.1} parent=5 // pred_region
        %s214 = ssub.s32 %s27, 1
        %s215 = sand.u32 %s40, 1
        %s216 = scalar_lea.sflag [#allocation9], %s215
        %s217 = sand.u32 %s40, 1
        %s218 = smul.addr %s217, 128
        %s219 = scalar_lea.vmem [#allocation8], %s218
        // Predicated region
        $region33: #{tpu_custom_call.1} parent=31 // pred_check
          %p220 = pneg %p53
        $region34: #{tpu_custom_call.1} parent=31 // pred_check_branch
          %222 = sbr.rel (%p220) target = $region36
        $region35: #{tpu_custom_call.1} parent=31 // pred_region
          %224 = dma.done %s216, 2048
        $region36: #{tpu_custom_call.1} parent=31 // pred_fallthru
          _
        %s225 = sand.u32 %s32, 1
        %s226 = scalar_lea.sflag [#allocation12], %s225
        %s227 = sand.u32 %s66, 1
        %s228 = smul.addr %s227, 128
        %s229 = scalar_lea.vmem [#allocation11], %s228
        // Predicated region
        $region37: #{tpu_custom_call.1} parent=31 // pred_check
          %p230 = pneg %p79
        $region38: #{tpu_custom_call.1} parent=31 // pred_check_branch
          %232 = sbr.rel (%p230) target = $region40
        $region39: #{tpu_custom_call.1} parent=31 // pred_region
          %234 = dma.done %s226, 2048
        $region40: #{tpu_custom_call.1} parent=31 // pred_fallthru
          _
        %s235 = sand.u32 %s32, 1
        %s236 = scalar_lea.sflag [#allocation12], %s235
        %s237 = sand.u32 %s92, 1
        %s238 = smul.addr %s237, 8
        %s239 = scalar_lea.vmem [#allocation13], %s238
        // Predicated region
        $region41: #{tpu_custom_call.1} parent=31 // pred_check
          %p240 = pneg %p105
        $region42: #{tpu_custom_call.1} parent=31 // pred_check_branch
          %242 = sbr.rel (%p240) target = $region44
        $region43: #{tpu_custom_call.1} parent=31 // pred_region
          %244 = dma.done %s236, 128
        $region44: #{tpu_custom_call.1} parent=31 // pred_fallthru
          _
        %s245 = sand.u32 %s40, 1
        %s246 = scalar_lea.sflag [#allocation9], %s245
        %s247 = sand.u32 %s40, 1
        %s248 = smul.addr %s247, 128
        %s249 = scalar_lea.vmem [#allocation8], %s248
        %p250 = pneg %p53
        %p251 = pneg %p50
        %s252 = sand.u32 %s32, 1
        %s253 = scalar_lea.sflag [#allocation12], %s252
        %s254 = sand.u32 %s66, 1
        %s255 = smul.addr %s254, 128
        %s256 = scalar_lea.vmem [#allocation11], %s255
        %p257 = pneg %p79
        %p258 = pneg %p76
        %s259 = sand.u32 %s32, 1
        %s260 = scalar_lea.sflag [#allocation12], %s259
        %s261 = sand.u32 %s92, 1
        %s262 = smul.addr %s261, 8
        %s263 = scalar_lea.vmem [#allocation13], %s262
        %p264 = pneg %p105
        %p265 = pneg %p102
        %p266 = pneg %p126
        %p267 = pneg %p123
        %p268 = scmp.eq.s32.totalorder %s32, 0
        // Predicated region
        $region45: #{tpu_custom_call.1} parent=31 // pred_check
          %p269 = pneg %p268
        $region46: #{tpu_custom_call.1} parent=31 // pred_check_branch
          %271 = sbr.rel (%p269) target = $region48
        $region47: #{tpu_custom_call.1} parent=31 // pred_region
          // Predicated region
          $region49: #{tpu_custom_call.1} parent=47 // pred_check
            _
          $region50: #{tpu_custom_call.1} parent=47 // pred_check_branch
            %273 = sbr.rel target = $region52
          $region51: #{tpu_custom_call.1} parent=47 // pred_region
            %274 = sst [smem:[#allocation17]] [#allocation16]
            %275 = sst [smem:[#allocation18]] [#allocation15]
          $region52: #{tpu_custom_call.1} parent=47 // pred_fallthru
            _
          %277 = shalt.err (0)
          %s279 = sshll.u32 %s1, 4
          %s280 = int_to_ptr.hbm [resolvable:$true] %s279
          %s281 = sshll.u32 [#allocation3], 4
          %s282 = int_to_ptr.vmem [resolvable:$true] %s281
          %284 = dma.hbm_to_vmem [thread:$0]  %s280, 2048, %s282, [#allocation5]
          %s285 = scalar_lea.sflag [#allocation5], 1
          // Predicated region
          $region53: #{tpu_custom_call.1} parent=47 // pred_check
            _
          $region54: #{tpu_custom_call.1} parent=47 // pred_check_branch
            %287 = sbr.rel target = $region56
          $region55: #{tpu_custom_call.1} parent=47 // pred_region
            %288 = sst [smem:[#allocation17]] [#allocation20]
            %289 = sst [smem:[#allocation18]] [#allocation19]
          $region56: #{tpu_custom_call.1} parent=47 // pred_fallthru
            _
          %291 = shalt.err (0)
          %s293 = sshll.u32 %s2, 4
          %s294 = int_to_ptr.hbm [resolvable:$true] %s293
          %s295 = sshll.u32 [#allocation2], 4
          %s296 = int_to_ptr.vmem [resolvable:$true] %s295
          %298 = dma.hbm_to_vmem [thread:$0]  %s294, 2048, %s296, %s285
          %s299 = smul.u32 128, 1
          %s300 = sshll.u32 %s299, 4
          %301 = dma.done [#allocation5], %s300
          %s302 = sshll.u32 %s299, 4
          %303 = dma.done %s285, %s302
          %v304 = vlaneseq
          %v305 = vshrl.u32 %v304, 7
          %v306 = vadd.s32 %v305, 8
          %v307 = vadd.s32 %v305, 16
          %v308 = vadd.s32 %v305, 24
          %v309 = vadd.s32 %v305, 32
          %v310 = vadd.s32 %v305, 40
          %v311 = vadd.s32 %v305, 48
          %v312 = vadd.s32 %v305, 56
          %v313 = vadd.s32 %v305, 64
          %v314 = vadd.s32 %v305, 72
          %v315 = vadd.s32 %v305, 80
          %v316 = vadd.s32 %v305, 88
          %v317 = vadd.s32 %v305, 96
          %v318 = vadd.s32 %v305, 104
          %v319 = vadd.s32 %v305, 112
          %v320 = vadd.s32 %v305, 120
          %vm321 = vcmp.lt.s32.totalorder %v305, 48
          %vm322 = vcmp.lt.s32.totalorder %v306, 48
          %vm323 = vcmp.lt.s32.totalorder %v307, 48
          %vm324 = vcmp.lt.s32.totalorder %v308, 48
          %vm325 = vcmp.lt.s32.totalorder %v309, 48
          %vm326 = vcmp.lt.s32.totalorder %v310, 48
          %vm327 = vcmp.lt.s32.totalorder %v311, 48
          %vm328 = vcmp.lt.s32.totalorder %v312, 48
          %vm329 = vcmp.lt.s32.totalorder %v313, 48
          %vm330 = vcmp.lt.s32.totalorder %v314, 48
          %vm331 = vcmp.lt.s32.totalorder %v315, 48
          %vm332 = vcmp.lt.s32.totalorder %v316, 48
          %vm333 = vcmp.lt.s32.totalorder %v317, 48
          %vm334 = vcmp.lt.s32.totalorder %v318, 48
          %vm335 = vcmp.lt.s32.totalorder %v319, 48
          %vm336 = vcmp.lt.s32.totalorder %v320, 48
          %v337 = vsel %vm321, 1, 0
          %v338 = vsel %vm322, 1, 0
          %v339 = vsel %vm323, 1, 0
          %v340 = vsel %vm324, 1, 0
          %v341 = vsel %vm325, 1, 0
          %v342 = vsel %vm326, 1, 0
          %v343 = vsel %vm327, 1, 0
          %v344 = vsel %vm328, 1, 0
          %v345 = vsel %vm329, 1, 0
          %v346 = vsel %vm330, 1, 0
          %v347 = vsel %vm331, 1, 0
          %v348 = vsel %vm332, 1, 0
          %v349 = vsel %vm333, 1, 0
          %v350 = vsel %vm334, 1, 0
          %v351 = vsel %vm335, 1, 0
          %v352 = vsel %vm336, 1, 0
          %v353 = vcvt.s32.f32 %v337
          %v354 = vcvt.s32.f32 %v338
          %v355 = vcvt.s32.f32 %v339
          %v356 = vcvt.s32.f32 %v340
          %v357 = vcvt.s32.f32 %v341
          %v358 = vcvt.s32.f32 %v342
          %v359 = vcvt.s32.f32 %v343
          %v360 = vcvt.s32.f32 %v344
          %v361 = vcvt.s32.f32 %v345
          %v362 = vcvt.s32.f32 %v346
          %v363 = vcvt.s32.f32 %v347
          %v364 = vcvt.s32.f32 %v348
          %v365 = vcvt.s32.f32 %v349
          %v366 = vcvt.s32.f32 %v350
          %v367 = vcvt.s32.f32 %v351
          %v368 = vcvt.s32.f32 %v352
          %vm369 = vcmask 7168
          %370 = vst.msk [vmem:[#allocation4] sm:$0xff] %vm369, %v353
          %371 = vst.msk [vmem:[#allocation4 + $0x8] sm:$0xff] %vm369, %v354
          %372 = vst.msk [vmem:[#allocation4 + $0x10] sm:$0xff] %vm369, %v355
          %373 = vst.msk [vmem:[#allocation4 + $0x18] sm:$0xff] %vm369, %v356
          %374 = vst.msk [vmem:[#allocation4 + $0x20] sm:$0xff] %vm369, %v357
          %375 = vst.msk [vmem:[#allocation4 + $0x28] sm:$0xff] %vm369, %v358
          %376 = vst.msk [vmem:[#allocation4 + $0x30] sm:$0xff] %vm369, %v359
          %377 = vst.msk [vmem:[#allocation4 + $0x38] sm:$0xff] %vm369, %v360
          %378 = vst.msk [vmem:[#allocation4 + $0x40] sm:$0xff] %vm369, %v361
          %379 = vst.msk [vmem:[#allocation4 + $0x48] sm:$0xff] %vm369, %v362
          %380 = vst.msk [vmem:[#allocation4 + $0x50] sm:$0xff] %vm369, %v363
          %381 = vst.msk [vmem:[#allocation4 + $0x58] sm:$0xff] %vm369, %v364
          %382 = vst.msk [vmem:[#allocation4 + $0x60] sm:$0xff] %vm369, %v365
          %383 = vst.msk [vmem:[#allocation4 + $0x68] sm:$0xff] %vm369, %v366
          %384 = vst.msk [vmem:[#allocation4 + $0x70] sm:$0xff] %vm369, %v367
          %385 = vst.msk [vmem:[#allocation4 + $0x78] sm:$0xff] %vm369, %v368
        $region48: #{tpu_custom_call.1} parent=31 // pred_fallthru
          _
        %v386 = vld [vmem:[#allocation2] sm:$0xff]
        %v387 = vld [vmem:[#allocation2 + $0x8] sm:$0xff]
        %v388 = vld [vmem:[#allocation2 + $0x10] sm:$0xff]
        %v389 = vld [vmem:[#allocation2 + $0x18] sm:$0xff]
        %v390 = vld [vmem:[#allocation2 + $0x20] sm:$0xff]
        %v391 = vld [vmem:[#allocation2 + $0x28] sm:$0xff]
        %v392 = vld [vmem:[#allocation2 + $0x30] sm:$0xff]
        %v393 = vld [vmem:[#allocation2 + $0x38] sm:$0xff]
        %v394 = vld [vmem:[#allocation2 + $0x40] sm:$0xff]
        %v395 = vld [vmem:[#allocation2 + $0x48] sm:$0xff]
        %v396 = vld [vmem:[#allocation2 + $0x50] sm:$0xff]
        %v397 = vld [vmem:[#allocation2 + $0x58] sm:$0xff]
        %v398 = vld [vmem:[#allocation2 + $0x60] sm:$0xff]
        %v399 = vld [vmem:[#allocation2 + $0x68] sm:$0xff]
        %v400 = vld [vmem:[#allocation2 + $0x70] sm:$0xff]
        %v401 = vld [vmem:[#allocation2 + $0x78] sm:$0xff]
        %v402 = vld [vmem:[#allocation4] sm:$0xff]
        %v403 = vld [vmem:[#allocation4 + $0x8] sm:$0xff]
        %v404 = vld [vmem:[#allocation4 + $0x10] sm:$0xff]
        %v405 = vld [vmem:[#allocation4 + $0x18] sm:$0xff]
        %v406 = vld [vmem:[#allocation4 + $0x20] sm:$0xff]
        %v407 = vld [vmem:[#allocation4 + $0x28] sm:$0xff]
        %v408 = vld [vmem:[#allocation4 + $0x30] sm:$0xff]
        %v409 = vld [vmem:[#allocation4 + $0x38] sm:$0xff]
        %v410 = vld [vmem:[#allocation4 + $0x40] sm:$0xff]
        %v411 = vld [vmem:[#allocation4 + $0x48] sm:$0xff]
        %v412 = vld [vmem:[#allocation4 + $0x50] sm:$0xff]
        %v413 = vld [vmem:[#allocation4 + $0x58] sm:$0xff]
        %v414 = vld [vmem:[#allocation4 + $0x60] sm:$0xff]
        %v415 = vld [vmem:[#allocation4 + $0x68] sm:$0xff]
        %v416 = vld [vmem:[#allocation4 + $0x70] sm:$0xff]
        %v417 = vld [vmem:[#allocation4 + $0x78] sm:$0xff]
        %s418 = sld [smem:[#allocation7 + %s32]]
        %v419 = vld [vmem:[#allocation3] sm:$0xff]
        %v420 = vld [vmem:[#allocation3 + $0x8] sm:$0xff]
        %v421 = vld [vmem:[#allocation3 + $0x10] sm:$0xff]
        %v422 = vld [vmem:[#allocation3 + $0x18] sm:$0xff]
        %v423 = vld [vmem:[#allocation3 + $0x20] sm:$0xff]
        %v424 = vld [vmem:[#allocation3 + $0x28] sm:$0xff]
        %v425 = vld [vmem:[#allocation3 + $0x30] sm:$0xff]
        %v426 = vld [vmem:[#allocation3 + $0x38] sm:$0xff]
        %v427 = vld [vmem:[#allocation3 + $0x40] sm:$0xff]
        %v428 = vld [vmem:[#allocation3 + $0x48] sm:$0xff]
        %v429 = vld [vmem:[#allocation3 + $0x50] sm:$0xff]
        %v430 = vld [vmem:[#allocation3 + $0x58] sm:$0xff]
        %v431 = vld [vmem:[#allocation3 + $0x60] sm:$0xff]
        %v432 = vld [vmem:[#allocation3 + $0x68] sm:$0xff]
        %v433 = vld [vmem:[#allocation3 + $0x70] sm:$0xff]
        %v434 = vld [vmem:[#allocation3 + $0x78] sm:$0xff]
        %s435 = sadd.f32 %s418, 1.0
        %v436 = vstv %s435
        %v437 = vmul.f32 %v436, %v386
        %v438 = vmul.f32 %v436, %v387
        %v439 = vmul.f32 %v436, %v388
        %v440 = vmul.f32 %v436, %v389
        %v441 = vmul.f32 %v436, %v390
        %v442 = vmul.f32 %v436, %v391
        %v443 = vmul.f32 %v436, %v392
        %v444 = vmul.f32 %v436, %v393
        %v445 = vmul.f32 %v436, %v394
        %v446 = vmul.f32 %v436, %v395
        %v447 = vmul.f32 %v436, %v396
        %v448 = vmul.f32 %v436, %v397
        %v449 = vmul.f32 %v436, %v398
        %v450 = vmul.f32 %v436, %v399
        %v451 = vmul.f32 %v436, %v400
        %v452 = vmul.f32 %v436, %v401
        %453 = vmatpush.msra.mxu0 %v401
        %454 = vmatpush.msra.mxu0 %v400
        %455 = vmatpush.msra.mxu0 %v399
        %456 = vmatpush.msra.mxu0 %v398
        %457 = vmatpush.msra.mxu0 %v397
        %458 = vmatpush.msra.mxu0 %v396
        %459 = vmatpush.msra.mxu0 %v395
        %460 = vmatpush.msra.mxu0 %v394
        %461 = vmatpush.msra.mxu0 %v393
        %462 = vmatpush.msra.mxu0 %v392
        %463 = vmatpush.msra.mxu0 %v391
        %464 = vmatpush.msra.mxu0 %v390
        %465 = vmatpush.msra.mxu0 %v389
        %466 = vmatpush.msra.mxu0 %v388
        %467 = vmatpush.msra.mxu0 %v387
        %468 = vmatpush.msra.mxu0 %v386
        %469 = vmatmul.f32.gmra.mxu0 %v419
        %v470 = vpop.f32.mrf.mxu0
        %v471 = vadd.f32 %v437, %v470
        %472 = vmatmul.f32.gmra.mxu0 %v420
        %v473 = vpop.f32.mrf.mxu0
        %v474 = vadd.f32 %v438, %v473
        %475 = vmatmul.f32.gmra.mxu0 %v421
        %v476 = vpop.f32.mrf.mxu0
        %v477 = vadd.f32 %v439, %v476
        %478 = vmatmul.f32.gmra.mxu0 %v422
        %v479 = vpop.f32.mrf.mxu0
        %v480 = vadd.f32 %v440, %v479
        %481 = vmatmul.f32.gmra.mxu0 %v423
        %v482 = vpop.f32.mrf.mxu0
        %v483 = vadd.f32 %v441, %v482
        %484 = vmatmul.f32.gmra.mxu0 %v424
        %v485 = vpop.f32.mrf.mxu0
        %v486 = vadd.f32 %v442, %v485
        %487 = vmatmul.f32.gmra.mxu0 %v425
        %v488 = vpop.f32.mrf.mxu0
        %v489 = vadd.f32 %v443, %v488
        %490 = vmatmul.f32.gmra.mxu0 %v426
        %v491 = vpop.f32.mrf.mxu0
        %v492 = vadd.f32 %v444, %v491
        %493 = vmatmul.f32.gmra.mxu0 %v427
        %v494 = vpop.f32.mrf.mxu0
        %v495 = vadd.f32 %v445, %v494
        %496 = vmatmul.f32.gmra.mxu0 %v428
        %v497 = vpop.f32.mrf.mxu0
        %v498 = vadd.f32 %v446, %v497
        %499 = vmatmul.f32.gmra.mxu0 %v429
        %v500 = vpop.f32.mrf.mxu0
        %v501 = vadd.f32 %v447, %v500
        %502 = vmatmul.f32.gmra.mxu0 %v430
        %v503 = vpop.f32.mrf.mxu0
        %v504 = vadd.f32 %v448, %v503
        %505 = vmatmul.f32.gmra.mxu0 %v431
        %v506 = vpop.f32.mrf.mxu0
        %v507 = vadd.f32 %v449, %v506
        %508 = vmatmul.f32.gmra.mxu0 %v432
        %v509 = vpop.f32.mrf.mxu0
        %v510 = vadd.f32 %v450, %v509
        %511 = vmatmul.f32.gmra.mxu0 %v433
        %v512 = vpop.f32.mrf.mxu0
        %v513 = vadd.f32 %v451, %v512
        %514 = vmatmul.f32.gmra.mxu0 %v434
        %v515 = vpop.f32.mrf.mxu0
        %v516 = vadd.f32 %v452, %v515
        %517 = vdwg.mxu0
        %v518 = vld [vmem:[%s219] sm:$0xff]
        %v519 = vld [vmem:[%s219 + $0x8] sm:$0xff]
        %v520 = vld [vmem:[%s219 + $0x10] sm:$0xff]
        %v521 = vld [vmem:[%s219 + $0x18] sm:$0xff]
        %v522 = vld [vmem:[%s219 + $0x20] sm:$0xff]
        %v523 = vld [vmem:[%s219 + $0x28] sm:$0xff]
        %v524 = vld [vmem:[%s219 + $0x30] sm:$0xff]
        %v525 = vld [vmem:[%s219 + $0x38] sm:$0xff]
        %v526 = vld [vmem:[%s219 + $0x40] sm:$0xff]
        %v527 = vld [vmem:[%s219 + $0x48] sm:$0xff]
        %v528 = vld [vmem:[%s219 + $0x50] sm:$0xff]
        %v529 = vld [vmem:[%s219 + $0x58] sm:$0xff]
        %v530 = vld [vmem:[%s219 + $0x60] sm:$0xff]
        %v531 = vld [vmem:[%s219 + $0x68] sm:$0xff]
        %v532 = vld [vmem:[%s219 + $0x70] sm:$0xff]
        %v533 = vld [vmem:[%s219 + $0x78] sm:$0xff]
        %534 = vmatpush.msra.mxu0 %v533
        %535 = vmatpush.msra.mxu0 %v532
        %536 = vmatpush.msra.mxu0 %v531
        %537 = vmatpush.msra.mxu0 %v530
        %538 = vmatpush.msra.mxu0 %v529
        %539 = vmatpush.msra.mxu0 %v528
        %540 = vmatpush.msra.mxu0 %v527
        %541 = vmatpush.msra.mxu0 %v526
        %542 = vmatpush.msra.mxu0 %v525
        %543 = vmatpush.msra.mxu0 %v524
        %544 = vmatpush.msra.mxu0 %v523
        %545 = vmatpush.msra.mxu0 %v522
        %546 = vmatpush.msra.mxu0 %v521
        %547 = vmatpush.msra.mxu0 %v520
        %548 = vmatpush.msra.mxu0 %v519
        %549 = vmatpush.msra.mxu0 %v518
        %550 = vmatmul.f32.gmra.mxu0 %v471
        %v551 = vpop.f32.mrf.mxu0
        %v552 = vadd.f32 0.0, %v551
        %553 = vmatmul.f32.gmra.mxu0 %v474
        %v554 = vpop.f32.mrf.mxu0
        %v555 = vadd.f32 0.0, %v554
        %556 = vmatmul.f32.gmra.mxu0 %v477
        %v557 = vpop.f32.mrf.mxu0
        %v558 = vadd.f32 0.0, %v557
        %559 = vmatmul.f32.gmra.mxu0 %v480
        %v560 = vpop.f32.mrf.mxu0
        %v561 = vadd.f32 0.0, %v560
        %562 = vmatmul.f32.gmra.mxu0 %v483
        %v563 = vpop.f32.mrf.mxu0
        %v564 = vadd.f32 0.0, %v563
        %565 = vmatmul.f32.gmra.mxu0 %v486
        %v566 = vpop.f32.mrf.mxu0
        %v567 = vadd.f32 0.0, %v566
        %568 = vmatmul.f32.gmra.mxu0 %v489
        %v569 = vpop.f32.mrf.mxu0
        %v570 = vadd.f32 0.0, %v569
        %571 = vmatmul.f32.gmra.mxu0 %v492
        %v572 = vpop.f32.mrf.mxu0
        %v573 = vadd.f32 0.0, %v572
        %574 = vmatmul.f32.gmra.mxu0 %v495
        %v575 = vpop.f32.mrf.mxu0
        %v576 = vadd.f32 0.0, %v575
        %577 = vmatmul.f32.gmra.mxu0 %v498
        %v578 = vpop.f32.mrf.mxu0
        %v579 = vadd.f32 0.0, %v578
        %580 = vmatmul.f32.gmra.mxu0 %v501
        %v581 = vpop.f32.mrf.mxu0
        %v582 = vadd.f32 0.0, %v581
        %583 = vmatmul.f32.gmra.mxu0 %v504
        %v584 = vpop.f32.mrf.mxu0
        %v585 = vadd.f32 0.0, %v584
        %586 = vmatmul.f32.gmra.mxu0 %v507
        %v587 = vpop.f32.mrf.mxu0
        %v588 = vadd.f32 0.0, %v587
        %589 = vmatmul.f32.gmra.mxu0 %v510
        %v590 = vpop.f32.mrf.mxu0
        %v591 = vadd.f32 0.0, %v590
        %592 = vmatmul.f32.gmra.mxu0 %v513
        %v593 = vpop.f32.mrf.mxu0
        %v594 = vadd.f32 0.0, %v593
        %595 = vmatmul.f32.gmra.mxu0 %v516
        %v596 = vpop.f32.mrf.mxu0
        %v597 = vadd.f32 0.0, %v596
        %598 = vdwg.mxu0
        %600 = vset.pattern.permute.xlu0 0
        %601 = vperm.xlu0 %600, %v402
        %v602 = vpop.permute.xlu0 %601
        %605 = vset.pattern.permute.xlu0 0
        %606 = vperm.xlu0 %605, %v403
        %v607 = vpop.permute.xlu0 %606
        %610 = vset.pattern.permute.xlu0 0
        %611 = vperm.xlu0 %610, %v404
        %v612 = vpop.permute.xlu0 %611
        %615 = vset.pattern.permute.xlu0 0
        %616 = vperm.xlu0 %615, %v405
        %v617 = vpop.permute.xlu0 %616
        %620 = vset.pattern.permute.xlu0 0
        %621 = vperm.xlu0 %620, %v406
        %v622 = vpop.permute.xlu0 %621
        %625 = vset.pattern.permute.xlu0 0
        %626 = vperm.xlu0 %625, %v407
        %v627 = vpop.permute.xlu0 %626
        %630 = vset.pattern.permute.xlu0 0
        %631 = vperm.xlu0 %630, %v408
        %v632 = vpop.permute.xlu0 %631
        %635 = vset.pattern.permute.xlu0 0
        %636 = vperm.xlu0 %635, %v409
        %v637 = vpop.permute.xlu0 %636
        %640 = vset.pattern.permute.xlu0 0
        %641 = vperm.xlu0 %640, %v410
        %v642 = vpop.permute.xlu0 %641
        %645 = vset.pattern.permute.xlu0 0
        %646 = vperm.xlu0 %645, %v411
        %v647 = vpop.permute.xlu0 %646
        %650 = vset.pattern.permute.xlu0 0
        %651 = vperm.xlu0 %650, %v412
        %v652 = vpop.permute.xlu0 %651
        %655 = vset.pattern.permute.xlu0 0
        %656 = vperm.xlu0 %655, %v413
        %v657 = vpop.permute.xlu0 %656
        %660 = vset.pattern.permute.xlu0 0
        %661 = vperm.xlu0 %660, %v414
        %v662 = vpop.permute.xlu0 %661
        %665 = vset.pattern.permute.xlu0 0
        %666 = vperm.xlu0 %665, %v415
        %v667 = vpop.permute.xlu0 %666
        %670 = vset.pattern.permute.xlu0 0
        %671 = vperm.xlu0 %670, %v416
        %v672 = vpop.permute.xlu0 %671
        %675 = vset.pattern.permute.xlu0 0
        %676 = vperm.xlu0 %675, %v417
        %v677 = vpop.permute.xlu0 %676
        %v679 = vmul.f32 %v552, %v602
        %v680 = vmul.f32 %v555, %v607
        %v681 = vmul.f32 %v558, %v612
        %v682 = vmul.f32 %v561, %v617
        %v683 = vmul.f32 %v564, %v622
        %v684 = vmul.f32 %v567, %v627
        %v685 = vmul.f32 %v570, %v632
        %v686 = vmul.f32 %v573, %v637
        %v687 = vmul.f32 %v576, %v642
        %v688 = vmul.f32 %v579, %v647
        %v689 = vmul.f32 %v582, %v652
        %v690 = vmul.f32 %v585, %v657
        %v691 = vmul.f32 %v588, %v662
        %v692 = vmul.f32 %v591, %v667
        %v693 = vmul.f32 %v594, %v672
        %v694 = vmul.f32 %v597, %v677
        %v695 = vadd.f32 %v679, %v680
        %v696 = vadd.f32 %v695, %v681
        %v697 = vadd.f32 %v696, %v682
        %v698 = vadd.f32 %v697, %v683
        %v699 = vadd.f32 %v698, %v684
        %v700 = vadd.f32 %v699, %v685
        %v701 = vadd.f32 %v700, %v686
        %v702 = vadd.f32 %v701, %v687
        %v703 = vadd.f32 %v702, %v688
        %v704 = vadd.f32 %v703, %v689
        %v705 = vadd.f32 %v704, %v690
        %v706 = vadd.f32 %v705, %v691
        %v707 = vadd.f32 %v706, %v692
        %v708 = vadd.f32 %v707, %v693
        %v709 = vadd.f32 %v708, %v694
        %v710 = vrot.slane %v709, 4
        %v711 = vadd.f32 %v709, %v710
        %v712 = vrot.slane %v711, 2
        %v713 = vadd.f32 %v711, %v712
        %v714 = vrot.slane %v713, 1
        %v715 = vadd.f32 %v713, %v714
        %v716 = vmul.f32 %v715, 0.020833334
        %v717 = vmul.f32 %v679, %v552
        %v718 = vmul.f32 %v680, %v555
        %v719 = vmul.f32 %v681, %v558
        %v720 = vmul.f32 %v682, %v561
        %v721 = vmul.f32 %v683, %v564
        %v722 = vmul.f32 %v684, %v567
        %v723 = vmul.f32 %v685, %v570
        %v724 = vmul.f32 %v686, %v573
        %v725 = vmul.f32 %v687, %v576
        %v726 = vmul.f32 %v688, %v579
        %v727 = vmul.f32 %v689, %v582
        %v728 = vmul.f32 %v690, %v585
        %v729 = vmul.f32 %v691, %v588
        %v730 = vmul.f32 %v692, %v591
        %v731 = vmul.f32 %v693, %v594
        %v732 = vmul.f32 %v694, %v597
        %v733 = vadd.f32 %v717, %v718
        %v734 = vadd.f32 %v733, %v719
        %v735 = vadd.f32 %v734, %v720
        %v736 = vadd.f32 %v735, %v721
        %v737 = vadd.f32 %v736, %v722
        %v738 = vadd.f32 %v737, %v723
        %v739 = vadd.f32 %v738, %v724
        %v740 = vadd.f32 %v739, %v725
        %v741 = vadd.f32 %v740, %v726
        %v742 = vadd.f32 %v741, %v727
        %v743 = vadd.f32 %v742, %v728
        %v744 = vadd.f32 %v743, %v729
        %v745 = vadd.f32 %v744, %v730
        %v746 = vadd.f32 %v745, %v731
        %v747 = vadd.f32 %v746, %v732
        %v748 = vrot.slane %v747, 4
        %v749 = vadd.f32 %v747, %v748
        %v750 = vrot.slane %v749, 2
        %v751 = vadd.f32 %v749, %v750
        %v752 = vrot.slane %v751, 1
        %v753 = vadd.f32 %v751, %v752
        %v754 = vmul.f32 %v753, 0.020833334
        %v755 = vmul.f32 %v716, %v716
        %v756 = vsub.f32 %v754, %v755
        %v757 = vld [vmem:[%s239] sm:$0xff]
        %v758 = vsub.f32 %v552, %v716
        %v759 = vsub.f32 %v555, %v716
        %v760 = vsub.f32 %v558, %v716
        %v761 = vsub.f32 %v561, %v716
        %v762 = vsub.f32 %v564, %v716
        %v763 = vsub.f32 %v567, %v716
        %v764 = vsub.f32 %v570, %v716
        %v765 = vsub.f32 %v573, %v716
        %v766 = vsub.f32 %v576, %v716
        %v767 = vsub.f32 %v579, %v716
        %v768 = vsub.f32 %v582, %v716
        %v769 = vsub.f32 %v585, %v716
        %v770 = vsub.f32 %v588, %v716
        %v771 = vsub.f32 %v591, %v716
        %v772 = vsub.f32 %v594, %v716
        %v773 = vsub.f32 %v597, %v716
        %v774 = vadd.f32 %v756, 1e-05
        %v775 = vrsqrt.pop %v774
        %v776 = vmul.f32 %v775, %v774
        %v777 = vmul.f32 %v776, %v775
        %v778 = vmul.f32 0.5, %v777
        %v779 = vsub.f32 1.5, %v778
        %v780 = vmul.f32 %v775, %v779
        %vm781 = vweird.f32 %v774
        %vm782 = vweird.f32 %v775
        %vm783 = vmor %vm781, %vm782
        %v784 = vsel %vm783, %v775, %v780
        %v785 = vmul.f32 %v758, %v784
        %v786 = vmul.f32 %v759, %v784
        %v787 = vmul.f32 %v760, %v784
        %v788 = vmul.f32 %v761, %v784
        %v789 = vmul.f32 %v762, %v784
        %v790 = vmul.f32 %v763, %v784
        %v791 = vmul.f32 %v764, %v784
        %v792 = vmul.f32 %v765, %v784
        %v793 = vmul.f32 %v766, %v784
        %v794 = vmul.f32 %v767, %v784
        %v795 = vmul.f32 %v768, %v784
        %v796 = vmul.f32 %v769, %v784
        %v797 = vmul.f32 %v770, %v784
        %v798 = vmul.f32 %v771, %v784
        %v799 = vmul.f32 %v772, %v784
        %v800 = vmul.f32 %v773, %v784
        %v801 = vperm.slane %v757, 0
        %v802 = vmul.f32 %v785, %v801
        %v803 = vmul.f32 %v786, %v801
        %v804 = vmul.f32 %v787, %v801
        %v805 = vmul.f32 %v788, %v801
        %v806 = vmul.f32 %v789, %v801
        %v807 = vmul.f32 %v790, %v801
        %v808 = vmul.f32 %v791, %v801
        %v809 = vmul.f32 %v792, %v801
        %v810 = vmul.f32 %v793, %v801
        %v811 = vmul.f32 %v794, %v801
        %v812 = vmul.f32 %v795, %v801
        %v813 = vmul.f32 %v796, %v801
        %v814 = vmul.f32 %v797, %v801
        %v815 = vmul.f32 %v798, %v801
        %v816 = vmul.f32 %v799, %v801
        %v817 = vmul.f32 %v800, %v801
        %v818 = vperm.slane %v757, 1
        %v819 = vadd.f32 %v802, %v818
        %v820 = vadd.f32 %v803, %v818
        %v821 = vadd.f32 %v804, %v818
        %v822 = vadd.f32 %v805, %v818
        %v823 = vadd.f32 %v806, %v818
        %v824 = vadd.f32 %v807, %v818
        %v825 = vadd.f32 %v808, %v818
        %v826 = vadd.f32 %v809, %v818
        %v827 = vadd.f32 %v810, %v818
        %v828 = vadd.f32 %v811, %v818
        %v829 = vadd.f32 %v812, %v818
        %v830 = vadd.f32 %v813, %v818
        %v831 = vadd.f32 %v814, %v818
        %v832 = vadd.f32 %v815, %v818
        %v833 = vadd.f32 %v816, %v818
        %v834 = vadd.f32 %v817, %v818
        %v835 = vmax.f32 %v819, 0.0
        %v836 = vmax.f32 %v820, 0.0
        %v837 = vmax.f32 %v821, 0.0
        %v838 = vmax.f32 %v822, 0.0
        %v839 = vmax.f32 %v823, 0.0
        %v840 = vmax.f32 %v824, 0.0
        %v841 = vmax.f32 %v825, 0.0
        %v842 = vmax.f32 %v826, 0.0
        %v843 = vmax.f32 %v827, 0.0
        %v844 = vmax.f32 %v828, 0.0
        %v845 = vmax.f32 %v829, 0.0
        %v846 = vmax.f32 %v830, 0.0
        %v847 = vmax.f32 %v831, 0.0
        %v848 = vmax.f32 %v832, 0.0
        %v849 = vmax.f32 %v833, 0.0
        %v850 = vmax.f32 %v834, 0.0
        %v851 = vld [vmem:[%s229] sm:$0xff]
        %v852 = vld [vmem:[%s229 + $0x8] sm:$0xff]
        %v853 = vld [vmem:[%s229 + $0x10] sm:$0xff]
        %v854 = vld [vmem:[%s229 + $0x18] sm:$0xff]
        %v855 = vld [vmem:[%s229 + $0x20] sm:$0xff]
        %v856 = vld [vmem:[%s229 + $0x28] sm:$0xff]
        %v857 = vld [vmem:[%s229 + $0x30] sm:$0xff]
        %v858 = vld [vmem:[%s229 + $0x38] sm:$0xff]
        %v859 = vld [vmem:[%s229 + $0x40] sm:$0xff]
        %v860 = vld [vmem:[%s229 + $0x48] sm:$0xff]
        %v861 = vld [vmem:[%s229 + $0x50] sm:$0xff]
        %v862 = vld [vmem:[%s229 + $0x58] sm:$0xff]
        %v863 = vld [vmem:[%s229 + $0x60] sm:$0xff]
        %v864 = vld [vmem:[%s229 + $0x68] sm:$0xff]
        %v865 = vld [vmem:[%s229 + $0x70] sm:$0xff]
        %v866 = vld [vmem:[%s229 + $0x78] sm:$0xff]
        %v867 = vperm.slane %v757, 2
        %868 = vmatpush.msra.mxu0 %v866
        %869 = vmatpush.msra.mxu0 %v865
        %870 = vmatpush.msra.mxu0 %v864
        %871 = vmatpush.msra.mxu0 %v863
        %872 = vmatpush.msra.mxu0 %v862
        %873 = vmatpush.msra.mxu0 %v861
        %874 = vmatpush.msra.mxu0 %v860
        %875 = vmatpush.msra.mxu0 %v859
        %876 = vmatpush.msra.mxu0 %v858
        %877 = vmatpush.msra.mxu0 %v857
        %878 = vmatpush.msra.mxu0 %v856
        %879 = vmatpush.msra.mxu0 %v855
        %880 = vmatpush.msra.mxu0 %v854
        %881 = vmatpush.msra.mxu0 %v853
        %882 = vmatpush.msra.mxu0 %v852
        %883 = vmatpush.msra.mxu0 %v851
        %884 = vmatmul.f32.gmra.mxu0 %v835
        %v885 = vpop.f32.mrf.mxu0
        %v886 = vadd.f32 %v867, %v885
        %887 = vmatmul.f32.gmra.mxu0 %v836
        %v888 = vpop.f32.mrf.mxu0
        %v889 = vadd.f32 %v867, %v888
        %890 = vmatmul.f32.gmra.mxu0 %v837
        %v891 = vpop.f32.mrf.mxu0
        %v892 = vadd.f32 %v867, %v891
        %893 = vmatmul.f32.gmra.mxu0 %v838
        %v894 = vpop.f32.mrf.mxu0
        %v895 = vadd.f32 %v867, %v894
        %896 = vmatmul.f32.gmra.mxu0 %v839
        %v897 = vpop.f32.mrf.mxu0
        %v898 = vadd.f32 %v867, %v897
        %899 = vmatmul.f32.gmra.mxu0 %v840
        %v900 = vpop.f32.mrf.mxu0
        %v901 = vadd.f32 %v867, %v900
        %902 = vmatmul.f32.gmra.mxu0 %v841
        %v903 = vpop.f32.mrf.mxu0
        %v904 = vadd.f32 %v867, %v903
        %905 = vmatmul.f32.gmra.mxu0 %v842
        %v906 = vpop.f32.mrf.mxu0
        %v907 = vadd.f32 %v867, %v906
        %908 = vmatmul.f32.gmra.mxu0 %v843
        %v909 = vpop.f32.mrf.mxu0
        %v910 = vadd.f32 %v867, %v909
        %911 = vmatmul.f32.gmra.mxu0 %v844
        %v912 = vpop.f32.mrf.mxu0
        %v913 = vadd.f32 %v867, %v912
        %914 = vmatmul.f32.gmra.mxu0 %v845
        %v915 = vpop.f32.mrf.mxu0
        %v916 = vadd.f32 %v867, %v915
        %917 = vmatmul.f32.gmra.mxu0 %v846
        %v918 = vpop.f32.mrf.mxu0
        %v919 = vadd.f32 %v867, %v918
        %920 = vmatmul.f32.gmra.mxu0 %v847
        %v921 = vpop.f32.mrf.mxu0
        %v922 = vadd.f32 %v867, %v921
        %923 = vmatmul.f32.gmra.mxu0 %v848
        %v924 = vpop.f32.mrf.mxu0
        %v925 = vadd.f32 %v867, %v924
        %926 = vmatmul.f32.gmra.mxu0 %v849
        %v927 = vpop.f32.mrf.mxu0
        %v928 = vadd.f32 %v867, %v927
        %929 = vmatmul.f32.gmra.mxu0 %v850
        %v930 = vpop.f32.mrf.mxu0
        %v931 = vadd.f32 %v867, %v930
        %932 = vdwg.mxu0
        %933 = vst [vmem:[#allocation2] sm:$0xff] %v886
        %934 = vst [vmem:[#allocation2 + $0x8] sm:$0xff] %v889
        %935 = vst [vmem:[#allocation2 + $0x10] sm:$0xff] %v892
        %936 = vst [vmem:[#allocation2 + $0x18] sm:$0xff] %v895
        %937 = vst [vmem:[#allocation2 + $0x20] sm:$0xff] %v898
        %938 = vst [vmem:[#allocation2 + $0x28] sm:$0xff] %v901
        %939 = vst [vmem:[#allocation2 + $0x30] sm:$0xff] %v904
        %940 = vst [vmem:[#allocation2 + $0x38] sm:$0xff] %v907
        %941 = vst [vmem:[#allocation2 + $0x40] sm:$0xff] %v910
        %942 = vst [vmem:[#allocation2 + $0x48] sm:$0xff] %v913
        %943 = vst [vmem:[#allocation2 + $0x50] sm:$0xff] %v916
        %944 = vst [vmem:[#allocation2 + $0x58] sm:$0xff] %v919
        %945 = vst [vmem:[#allocation2 + $0x60] sm:$0xff] %v922
        %946 = vst [vmem:[#allocation2 + $0x68] sm:$0xff] %v925
        %947 = vst [vmem:[#allocation2 + $0x70] sm:$0xff] %v928
        %948 = vst [vmem:[#allocation2 + $0x78] sm:$0xff] %v931
        %p949 = scmp.eq.s32.totalorder %s32, 2
        // Predicated region
        $region57: #{tpu_custom_call.1} parent=31 // pred_check
          %p950 = pneg %p949
        $region58: #{tpu_custom_call.1} parent=31 // pred_check_branch
          %952 = sbr.rel (%p950) target = $region60
        $region59: #{tpu_custom_call.1} parent=31 // pred_region
          %953 = vst [vmem:[#allocation14] sm:$0xff] %v886
          %954 = vst [vmem:[#allocation14 + $0x8] sm:$0xff] %v889
          %955 = vst [vmem:[#allocation14 + $0x10] sm:$0xff] %v892
          %956 = vst [vmem:[#allocation14 + $0x18] sm:$0xff] %v895
          %957 = vst [vmem:[#allocation14 + $0x20] sm:$0xff] %v898
          %958 = vst [vmem:[#allocation14 + $0x28] sm:$0xff] %v901
          %959 = vst [vmem:[#allocation14 + $0x30] sm:$0xff] %v904
          %960 = vst [vmem:[#allocation14 + $0x38] sm:$0xff] %v907
          %961 = vst [vmem:[#allocation14 + $0x40] sm:$0xff] %v910
          %962 = vst [vmem:[#allocation14 + $0x48] sm:$0xff] %v913
          %963 = vst [vmem:[#allocation14 + $0x50] sm:$0xff] %v916
          %964 = vst [vmem:[#allocation14 + $0x58] sm:$0xff] %v919
          %965 = vst [vmem:[#allocation14 + $0x60] sm:$0xff] %v922
          %966 = vst [vmem:[#allocation14 + $0x68] sm:$0xff] %v925
          %967 = vst [vmem:[#allocation14 + $0x70] sm:$0xff] %v928
          %968 = vst [vmem:[#allocation14 + $0x78] sm:$0xff] %v931
        $region60: #{tpu_custom_call.1} parent=31 // pred_fallthru
          _
        // Predicated region
        $region61: #{tpu_custom_call.1} parent=31 // pred_check
          %p969 = pneg %p123
        $region62: #{tpu_custom_call.1} parent=31 // pred_check_branch
          %971 = sbr.rel (%p969) target = $region64
        $region63: #{tpu_custom_call.1} parent=31 // pred_region
          %973 = vsyncadd [#allocation10], 0
          %s974 = sshll.u32 [#allocation14], 4
          %s975 = int_to_ptr.vmem [resolvable:$true] %s974
          %s976 = sshll.u32 %s6, 4
          %s977 = int_to_ptr.hbm [resolvable:$true] %s976
          %982 = dma.vmem_to_hbm [thread:$0]  %s975, 2048, %s977, [#allocation10], 128, 128, 8
        $region64: #{tpu_custom_call.1} parent=31 // pred_fallthru
          _
        // Predicated region
        $region65: #{tpu_custom_call.1} parent=31 // pred_check
          %p983 = pneg %p123
        $region66: #{tpu_custom_call.1} parent=31 // pred_check_branch
          %985 = sbr.rel (%p983) target = $region68
        $region67: #{tpu_custom_call.1} parent=31 // pred_region
          %987 = dma.done [#allocation10], 2048
        $region68: #{tpu_custom_call.1} parent=31 // pred_fallthru
          _
      $region32: #{tpu_custom_call.1} parent=5 // pred_fallthru
        _
      %p988 = scmp.le.s32.totalorder 2, %s27
      // Predicated region
      $region69: #{tpu_custom_call.1} parent=5 // pred_check
        %p989 = pneg %p988
      $region70: #{tpu_custom_call.1} parent=5 // pred_check_branch
        %991 = sbr.rel (%p989) target = $region72
      $region71: #{tpu_custom_call.1} parent=5 // pred_region
        %s992 = ssub.s32 %s27, 2
      $region72: #{tpu_custom_call.1} parent=5 // pred_fallthru
        _
    $region6: #{tpu_custom_call.1} parent=1 // loop_footer
      %s31 = sadd.s32 1, %s27
    $region7: #{tpu_custom_call.1} parent=1 // loop_footer_branch
      %26 = sbr.rel target = $region3
    $region8: #{tpu_custom_call.1} parent=1 // loop_exit
      _
    %993 = vsyncpa [#allocation9], 1
    %s994 = scalar_lea.sflag [#allocation9], 1
    %995 = vsyncpa %s994, 1
    %996 = vsyncpa [#allocation12], 1
    %s997 = scalar_lea.sflag [#allocation12], 1
    %998 = vsyncpa %s997, 1
    %999 = vsyncpa [#allocation10], 1
    %s1000 = scalar_lea.sflag [#allocation10], 1
    %1001 = vsyncpa %s1000, 1
  %1002 = vsyncmov [#allocation5]
  %s1003 = vpop.sfrf %1002
  %p1004 = scmp.eq.s32.totalorder %s1003, 0
  %p1005 = pneg %p1004
  %1007 = shalt.err (%p1005)
  %s1008 = scalar_lea.sflag [#allocation5], 1
  %1009 = vsyncmov %s1008
  %s1010 = vpop.sfrf %1009
  %p1011 = scmp.eq.s32.totalorder %s1010, 0
  %p1012 = pneg %p1011
  %1014 = shalt.err (%p1012)

</llo_original>
